<compile_context>
chip_gen: v7x
topology: tpu7x:2x2x1
jax: 0.10.0
libtpu: 0.0.40
codegen_flags: <defaults>
</compile_context>

<pallas_src>
import math

import jax
import jax.numpy as jnp
from jax import lax
from jax.experimental import pallas as pl
from jax.experimental.pallas import tpu as pltpu

B, T, MODEL_DIM, STATE_DIM, K = 2, 8, 32, 16, 3
PAD = (K - 1) // 2          # matches PyTorch Conv1d padding='same' for odd K
USE_TEMPORAL_CONV = True

# Row layout of the packed weight slab: [W_in_folded | W_Bstage | W_out]
_WB_ROWS = K * STATE_DIM if USE_TEMPORAL_CONV else STATE_DIM
_OFF_WB = MODEL_DIM
_OFF_WOUT = MODEL_DIM + _WB_ROWS
_SLAB_ROWS = _OFF_WOUT + STATE_DIM
_SLAB_COLS = max(2 * STATE_DIM, MODEL_DIM)


def lru_layer_kernel(x_ref, w_ref, ct_ref, b_ref, y_ref):
    S, Dm = STATE_DIM, MODEL_DIM
    Tlen = x_ref.shape[1]
    x = x_ref[0]                                    # (T, Dm) original input (residual)

    # --- LayerNorm statistics (affine folded into W_in / b_in host-side) ---
    mu = jnp.mean(x, axis=-1, keepdims=True)
    xc = x - mu
    var = jnp.mean(xc * xc, axis=-1, keepdims=True)
    xn = xc * lax.rsqrt(var + 1e-5)

    # --- proj_initial (+ folded LayerNorm affine), split gate / temporal path ---
    proj = (jnp.dot(xn, w_ref[0:Dm, 0:2 * S], preferred_element_type=jnp.float32)
            + b_ref[0:1, 0:2 * S])                  # (T, 2S)
    xg = proj[:, :S]                                # gate path
    v = proj[:, S:]                                 # temporal path

    # --- 'same' conv fused with the LRU B-projection: one im2col matmul ---
    if USE_TEMPORAL_CONV:
        zpad = jnp.zeros((PAD, S), jnp.float32)
        v_pad = jnp.concatenate([zpad, v, zpad], axis=0)          # (T+K-1, S) in-register
        im2col = jnp.concatenate([v_pad[k:k + Tlen, :] for k in range(K)],
                                 axis=-1)                          # (T, K*S)
        b_elems = (jnp.dot(im2col, w_ref[_OFF_WB:_OFF_WOUT, 0:2 * S],
                           preferred_element_type=jnp.float32)
                   + b_ref[1:2, 0:2 * S])                          # (T, 2S) = [re | im]
    else:
        b_elems = jnp.dot(v, w_ref[_OFF_WB:_OFF_WOUT, 0:2 * S],
                          preferred_element_type=jnp.float32)

    lam = b_ref[3:4, 0:2 * S]
    l_re, l_im = lam[:, :S], lam[:, S:]
    b_re_all, b_im_all = b_elems[:, :S], b_elems[:, S:]

    # --- diagonal complex recurrence, fully unrolled, carries live in vregs ---
    h_re = jnp.zeros((1, S), jnp.float32)
    h_im = jnp.zeros((1, S), jnp.float32)
    hs_re, hs_im = [], []
    for t in range(Tlen):                           # static unroll (T is small)
        n_re = l_re * h_re - l_im * h_im + b_re_all[t:t + 1, :]
        n_im = l_re * h_im + l_im * h_re + b_im_all[t:t + 1, :]
        hs_re.append(n_re)
        hs_im.append(n_im)
        h_re, h_im = n_re, n_im
    h_cat = jnp.concatenate([jnp.concatenate(hs_re, axis=0),
                             jnp.concatenate(hs_im, axis=0)], axis=-1)   # (T, 2S)

    # --- fused C-projection: Re(h @ C^T) via [C_re^T ; -C_im^T] ---
    v_out = jnp.dot(h_cat, ct_ref[...], preferred_element_type=jnp.float32)  # (T, S)

    # --- exact-erf GELU gate; nn.Dropout(0.2) is identity in eval mode ---
    # TODO(synk): dropout omitted (inference mode => identity).
    xa = 0.5 * xg * (1.0 + lax.erf(xg * 0.7071067811865476))
    gated = xa * v_out                              # (T, S)

    # --- proj_final + residual ---
    y = (jnp.dot(gated, w_ref[_OFF_WOUT:_OFF_WOUT + S, 0:Dm],
                 preferred_element_type=jnp.float32)
         + b_ref[2:3, 0:Dm])
    y_ref[0] = (y + x).astype(y_ref.dtype)


def pack_params(params):
    """Host-side algebra: fold LN affine, conv, B-norm and C into 3 operands."""
    (ln_g, ln_b, w_in, conv_w, conv_b, bnt_re, bnt_im,
     l_re, l_im, ct_re, ct_im, w_out, b_out) = params
    S = STATE_DIM

    bnt = jnp.concatenate([bnt_re, bnt_im], axis=-1)              # (S, 2S)

    # Fold LayerNorm gamma/beta into proj_initial.
    w_in_f = w_in * ln_g[0][:, None]                              # (Dm, 2S)
    b_in = ln_b @ w_in                                            # (1, 2S)

    if USE_TEMPORAL_CONV:
        # conv_w: (K, S_in, S_out); fold with B_norm^T so conv output IS B_elems.
        w_b = jnp.einsum('kio,on->kin', conv_w, bnt).reshape(K * S, 2 * S)
        b_b = conv_b @ bnt                                        # (1, 2S)
    else:
        w_b = bnt
        b_b = jnp.zeros((1, 2 * S), jnp.float32)

    def padw(a):
        return jnp.pad(a, ((0, 0), (0, _SLAB_COLS - a.shape[1])))

    w_slab = jnp.concatenate([padw(w_in_f), padw(w_b), padw(w_out)], axis=0)
    lam = jnp.concatenate([l_re, l_im], axis=-1)                  # (1, 2S)
    bias_slab = jnp.concatenate([padw(b_in), padw(b_b), padw(b_out), padw(lam)],
                                axis=0)                           # (4, _SLAB_COLS)
    ct_cat = jnp.concatenate([ct_re, -ct_im], axis=0)             # (2S, S)
    return w_slab, ct_cat, bias_slab


def lru_layer_forward(x, params):
    Bsz, Tlen, Dm = x.shape
    w_slab, ct_cat, bias_slab = pack_params(params)

    def rep(a):
        shp = a.shape
        return pl.BlockSpec(shp, lambda b, _n=len(shp): (0,) * _n)

    grid_spec = pltpu.PrefetchScalarGridSpec(
        num_scalar_prefetch=0,
        grid=(Bsz,),
        in_specs=[
            pl.BlockSpec((1, Tlen, Dm), lambda b: (b, 0, 0)),     # x (per-batch block)
            rep(w_slab),                                          # packed weights
            rep(ct_cat),                                          # [C_re^T; -C_im^T]
            rep(bias_slab),                                       # biases + lambda
        ],
        out_specs=pl.BlockSpec((1, Tlen, Dm), lambda b: (b, 0, 0)),
    )
    return pl.pallas_call(
        lru_layer_kernel,
        out_shape=jax.ShapeDtypeStruct((Bsz, Tlen, Dm), jnp.float32),
        grid_spec=grid_spec,
        compiler_params=pltpu.CompilerParams(
            dimension_semantics=("parallel",)),                   # v7x: batch over 2 TCs
    )(x, w_slab, ct_cat, bias_slab)


def init_params(key):
    Dm, S = MODEL_DIM, STATE_DIM
    r_min, r_max, phase_max = 0.8, 0.99, 2.0 * math.pi
    ks = jax.random.split(key, 11)

    ln_g = jnp.ones((1, Dm), jnp.float32)
    ln_b = jnp.zeros((1, Dm), jnp.float32)

    # proj_initial: Linear(Dm -> 2S, bias=False); stored as (Dm, 2S) = W.T
    lim_in = 1.0 / math.sqrt(Dm)
    w_in = jax.random.uniform(ks[0], (Dm, 2 * S), jnp.float32, -lim_in, lim_in)

    # Conv1d(S, S, K): torch weight (S_out, S_in, K), bias (S,)
    lim_cv = 1.0 / math.sqrt(S * K)
    conv_w_torch = jax.random.uniform(ks[1], (S, S, K), jnp.float32, -lim_cv, lim_cv)
    conv_b = jax.random.uniform(ks[2], (1, S), jnp.float32, -lim_cv, lim_cv)
    conv_w = jnp.transpose(conv_w_torch, (2, 1, 0))     # (K, S_in, S_out) = weight[:,:,k].T

    # --- LRU params, same recipe as the PyTorch __init__ ---
    u1 = jax.random.uniform(ks[3], (S,), jnp.float32)
    nu_log = jnp.log(-0.5 * jnp.log(u1 * (r_max + r_min) * (r_max - r_min) + r_min ** 2))
    u2 = jax.random.uniform(ks[4], (S,), jnp.float32)
    theta_log = jnp.log(phase_max * u2)
    l_mod = jnp.exp(-jnp.exp(nu_log))
    gamma_log = jnp.log(jnp.sqrt(1.0 - l_mod ** 2))
    b_re = jax.random.normal(ks[5], (S, S), jnp.float32) / math.sqrt(2 * S)
    b_im = jax.random.normal(ks[6], (S, S), jnp.float32) / math.sqrt(2 * S)
    c_re = jax.random.normal(ks[7], (S, S), jnp.float32) / math.sqrt(S)
    c_im = jax.random.normal(ks[8], (S, S), jnp.float32) / math.sqrt(S)

    # derived quantities (what LRU.forward computes from the parameters)
    theta = jnp.exp(theta_log)
    l_re = (l_mod * jnp.cos(theta)).reshape(1, S)
    l_im = (l_mod * jnp.sin(theta)).reshape(1, S)
    g = jnp.exp(gamma_log)[:, None]
    bnt_re = (b_re * g).T
    bnt_im = (b_im * g).T
    ct_re = c_re.T
    ct_im = c_im.T

    # proj_final: Linear(S -> Dm, bias); stored as (S, Dm) = W.T
    lim_out = 1.0 / math.sqrt(S)
    w_out = jax.random.uniform(ks[9], (S, Dm), jnp.float32, -lim_out, lim_out)
    b_out = jax.random.uniform(ks[10], (1, Dm), jnp.float32, -lim_out, lim_out)

    return (ln_g, ln_b, w_in, conv_w, conv_b, bnt_re, bnt_im,
            l_re, l_im, ct_re, ct_im, w_out, b_out)


def reference_forward(x, params):
    """Pure-JAX reference matching the PyTorch forward (eval mode)."""
    (ln_g, ln_b, w_in, conv_w, conv_b, bnt_re, bnt_im,
     l_re, l_im, ct_re, ct_im, w_out, b_out) = params
    S = STATE_DIM
    Tlen = x.shape[1]
    mu = x.mean(-1, keepdims=True)
    var = ((x - mu) ** 2).mean(-1, keepdims=True)
    xn = (x - mu) / jnp.sqrt(var + 1e-5) * ln_g[0] + ln_b[0]
    proj = xn @ w_in
    xg, v = proj[..., :S], proj[..., S:]
    if USE_TEMPORAL_CONV:
        vp = jnp.pad(v, ((0, 0), (PAD, PAD), (0, 0)))
        acc = jnp.zeros_like(v)
        for k in range(K):
            acc = acc + vp[:, k:k + Tlen, :] @ conv_w[k]
        v = acc + conv_b[0]
    lam = (l_re[0] + 1j * l_im[0]).astype(jnp.complex64)
    be = (v @ bnt_re + 1j * (v @ bnt_im)).astype(jnp.complex64)

    def step(h, b_t):
        h2 = lam * h + b_t
        return h2, h2

    h0 = jnp.zeros((x.shape[0], S), jnp.complex64)
    _, hs = lax.scan(step, h0, jnp.swapaxes(be, 0, 1))
    hs = jnp.swapaxes(hs, 0, 1)                          # (B, T, S)
    v_out = jnp.real(hs) @ ct_re - jnp.imag(hs) @ ct_im
    xa = jax.nn.gelu(xg, approximate=False)
    y = (xa * v_out) @ w_out + b_out[0]
    return y + x


if __name__ == "__main__":
    key = jax.random.PRNGKey(0)
    kx, kp = jax.random.split(key)
    x = jax.random.normal(kx, (B, T, MODEL_DIM), jnp.float32)
    params = init_params(kp)

    y = lru_layer_forward(x, params)
    y = jax.block_until_ready(y)

    y_ref = reference_forward(x, params)
    err = float(jnp.max(jnp.abs(y - y_ref)))
    assert err < 1e-4, f"max abs error too large: {err}"
    print("KERNEL_OK")
</pallas_src>

<mosaic_0001>
module attributes {stable_mosaic.version = 11 : i64} {
  func.func @lru_layer_kernel(%arg0: i32, %arg1: memref<1x8x32xf32, #tpu.memory_space<vmem>>, %arg2: memref<96x32xf32, #tpu.memory_space<vmem>>, %arg3: memref<32x16xf32, #tpu.memory_space<vmem>>, %arg4: memref<4x32xf32, #tpu.memory_space<vmem>>, %arg5: memref<1x8x32xf32, #tpu.memory_space<vmem>>) attributes {dimension_semantics = [#tpu.dimension_semantics<parallel>], iteration_bounds = array<i64: 2>, scalar_prefetch = 0 : i64, scratch_operands = 0 : i64, tpu.core_type = #tpu.core_type<tc>, window_params = [{transform_indices = @transform_0, window_bounds = array<i64: 1, 8, 32>}, {pipeline_mode = #tpu.pipeline_mode<synchronous>, transform_indices = @transform_1, window_bounds = array<i64: 96, 32>}, {pipeline_mode = #tpu.pipeline_mode<synchronous>, transform_indices = @transform_2, window_bounds = array<i64: 32, 16>}, {pipeline_mode = #tpu.pipeline_mode<synchronous>, transform_indices = @transform_3, window_bounds = array<i64: 4, 32>}, {transform_indices = @transform_4, window_bounds = array<i64: 1, 8, 32>}]} {
    %c0 = arith.constant 0 : index
    %c0_0 = arith.constant 0 : index
    %c0_1 = arith.constant 0 : index
    %0 = vector.load %arg1[%c0, %c0_0, %c0_1] : memref<1x8x32xf32, #tpu.memory_space<vmem>>, vector<1x8x32xf32>
    %1 = vector.shape_cast %0 : vector<1x8x32xf32> to vector<8x32xf32>
    %cst = arith.constant dense<0.000000e+00> : vector<8xf32>
    %2 = vector.multi_reduction <add>, %1, %cst [1] : vector<8x32xf32> to vector<8xf32>
    %3 = vector.shape_cast %2 : vector<8xf32> to vector<8x1xf32>
    %cst_2 = arith.constant 3.200000e+01 : f32
    %4 = vector.broadcast %cst_2 : f32 to vector<8x1xf32>
    %5 = arith.divf %3, %4 : vector<8x1xf32>
    %6 = vector.broadcast %5 : vector<8x1xf32> to vector<8x32xf32>
    %7 = arith.subf %1, %6 : vector<8x32xf32>
    %8 = arith.mulf %7, %7 : vector<8x32xf32>
    %cst_3 = arith.constant dense<0.000000e+00> : vector<8xf32>
    %9 = vector.multi_reduction <add>, %8, %cst_3 [1] : vector<8x32xf32> to vector<8xf32>
    %10 = vector.shape_cast %9 : vector<8xf32> to vector<8x1xf32>
    %cst_4 = arith.constant 3.200000e+01 : f32
    %11 = vector.broadcast %cst_4 : f32 to vector<8x1xf32>
    %12 = arith.divf %10, %11 : vector<8x1xf32>
    %cst_5 = arith.constant 9.99999974E-6 : f32
    %13 = vector.broadcast %cst_5 : f32 to vector<8x1xf32>
    %14 = arith.addf %12, %13 : vector<8x1xf32>
    %15 = math.rsqrt %14 : vector<8x1xf32>
    %16 = vector.broadcast %15 : vector<8x1xf32> to vector<8x32xf32>
    %17 = arith.mulf %7, %16 : vector<8x32xf32>
    %c0_6 = arith.constant 0 : index
    %c0_7 = arith.constant 0 : index
    %18 = vector.load %arg2[%c0_6, %c0_7] : memref<96x32xf32, #tpu.memory_space<vmem>>, vector<32x32xf32>
    %cst_8 = arith.constant dense<0.000000e+00> : vector<8x32xf32>
    %19 = tpu.matmul %17, %18, %cst_8 {dimension_numbers = #tpu.dot_dimension_numbers<[1], [0], [0], [1], [0, 0, 1, 1], [], []>} : vector<8x32xf32>, vector<32x32xf32>, vector<8x32xf32> -> vector<8x32xf32>
    %c0_9 = arith.constant 0 : index
    %c0_10 = arith.constant 0 : index
    %20 = vector.load %arg4[%c0_9, %c0_10] : memref<4x32xf32, #tpu.memory_space<vmem>>, vector<1x32xf32>
    %21 = vector.broadcast %20 : vector<1x32xf32> to vector<8x32xf32>
    %22 = arith.addf %19, %21 : vector<8x32xf32>
    %23 = vector.extract_strided_slice %22 {offsets = [0, 0], sizes = [8, 16], strides = [1, 1]} : vector<8x32xf32> to vector<8x16xf32>
    %24 = vector.extract_strided_slice %22 {offsets = [0, 16], sizes = [8, 16], strides = [1, 1]} : vector<8x32xf32> to vector<8x16xf32>
    %cst_11 = arith.constant 0.000000e+00 : f32
    %25 = vector.broadcast %cst_11 : f32 to vector<1x16xf32>
    %26 = tpu.concatenate %25, %24, %25 in 0 : vector<1x16xf32>, vector<8x16xf32>, vector<1x16xf32> -> vector<10x16xf32>
    %27 = vector.extract_strided_slice %26 {offsets = [0, 0], sizes = [8, 16], strides = [1, 1]} : vector<10x16xf32> to vector<8x16xf32>
    %28 = vector.extract_strided_slice %26 {offsets = [1, 0], sizes = [8, 16], strides = [1, 1]} : vector<10x16xf32> to vector<8x16xf32>
    %29 = vector.extract_strided_slice %26 {offsets = [2, 0], sizes = [8, 16], strides = [1, 1]} : vector<10x16xf32> to vector<8x16xf32>
    %30 = tpu.concatenate %27, %28, %29 in 1 : vector<8x16xf32>, vector<8x16xf32>, vector<8x16xf32> -> vector<8x48xf32>
    %c32 = arith.constant 32 : index
    %c0_12 = arith.constant 0 : index
    %31 = vector.load %arg2[%c32, %c0_12] : memref<96x32xf32, #tpu.memory_space<vmem>>, vector<48x32xf32>
    %cst_13 = arith.constant dense<0.000000e+00> : vector<8x32xf32>
    %32 = tpu.matmul %30, %31, %cst_13 {dimension_numbers = #tpu.dot_dimension_numbers<[1], [0], [0], [1], [0, 0, 1, 1], [], []>} : vector<8x48xf32>, vector<48x32xf32>, vector<8x32xf32> -> vector<8x32xf32>
    %c1 = arith.constant 1 : index
    %c0_14 = arith.constant 0 : index
    %33 = vector.load %arg4[%c1, %c0_14] : memref<4x32xf32, #tpu.memory_space<vmem>>, vector<1x32xf32>
    %34 = vector.broadcast %33 : vector<1x32xf32> to vector<8x32xf32>
    %35 = arith.addf %32, %34 : vector<8x32xf32>
    %c3 = arith.constant 3 : index
    %c0_15 = arith.constant 0 : index
    %36 = vector.load %arg4[%c3, %c0_15] : memref<4x32xf32, #tpu.memory_space<vmem>>, vector<1x32xf32>
    %37 = vector.extract_strided_slice %36 {offsets = [0, 0], sizes = [1, 16], strides = [1, 1]} : vector<1x32xf32> to vector<1x16xf32>
    %38 = vector.extract_strided_slice %36 {offsets = [0, 16], sizes = [1, 16], strides = [1, 1]} : vector<1x32xf32> to vector<1x16xf32>
    %39 = vector.extract_strided_slice %35 {offsets = [0, 0], sizes = [8, 16], strides = [1, 1]} : vector<8x32xf32> to vector<8x16xf32>
    %40 = vector.extract_strided_slice %35 {offsets = [0, 16], sizes = [8, 16], strides = [1, 1]} : vector<8x32xf32> to vector<8x16xf32>
    %cst_16 = arith.constant 0.000000e+00 : f32
    %41 = vector.broadcast %cst_16 : f32 to vector<1x16xf32>
    %cst_17 = arith.constant 0.000000e+00 : f32
    %42 = vector.broadcast %cst_17 : f32 to vector<1x16xf32>
    %43 = arith.mulf %37, %41 : vector<1x16xf32>
    %44 = arith.mulf %38, %42 : vector<1x16xf32>
    %45 = arith.subf %43, %44 : vector<1x16xf32>
    %46 = vector.extract_strided_slice %39 {offsets = [0, 0], sizes = [1, 16], strides = [1, 1]} : vector<8x16xf32> to vector<1x16xf32>
    %47 = arith.addf %45, %46 : vector<1x16xf32>
    %48 = arith.mulf %37, %42 : vector<1x16xf32>
    %49 = arith.mulf %38, %41 : vector<1x16xf32>
    %50 = arith.addf %48, %49 : vector<1x16xf32>
    %51 = vector.extract_strided_slice %40 {offsets = [0, 0], sizes = [1, 16], strides = [1, 1]} : vector<8x16xf32> to vector<1x16xf32>
    %52 = arith.addf %50, %51 : vector<1x16xf32>
    %53 = arith.mulf %37, %47 : vector<1x16xf32>
    %54 = arith.mulf %38, %52 : vector<1x16xf32>
    %55 = arith.subf %53, %54 : vector<1x16xf32>
    %56 = vector.extract_strided_slice %39 {offsets = [1, 0], sizes = [1, 16], strides = [1, 1]} : vector<8x16xf32> to vector<1x16xf32>
    %57 = arith.addf %55, %56 : vector<1x16xf32>
    %58 = arith.mulf %37, %52 : vector<1x16xf32>
    %59 = arith.mulf %38, %47 : vector<1x16xf32>
    %60 = arith.addf %58, %59 : vector<1x16xf32>
    %61 = vector.extract_strided_slice %40 {offsets = [1, 0], sizes = [1, 16], strides = [1, 1]} : vector<8x16xf32> to vector<1x16xf32>
    %62 = arith.addf %60, %61 : vector<1x16xf32>
    %63 = arith.mulf %37, %57 : vector<1x16xf32>
    %64 = arith.mulf %38, %62 : vector<1x16xf32>
    %65 = arith.subf %63, %64 : vector<1x16xf32>
    %66 = vector.extract_strided_slice %39 {offsets = [2, 0], sizes = [1, 16], strides = [1, 1]} : vector<8x16xf32> to vector<1x16xf32>
    %67 = arith.addf %65, %66 : vector<1x16xf32>
    %68 = arith.mulf %37, %62 : vector<1x16xf32>
    %69 = arith.mulf %38, %57 : vector<1x16xf32>
    %70 = arith.addf %68, %69 : vector<1x16xf32>
    %71 = vector.extract_strided_slice %40 {offsets = [2, 0], sizes = [1, 16], strides = [1, 1]} : vector<8x16xf32> to vector<1x16xf32>
    %72 = arith.addf %70, %71 : vector<1x16xf32>
    %73 = arith.mulf %37, %67 : vector<1x16xf32>
    %74 = arith.mulf %38, %72 : vector<1x16xf32>
    %75 = arith.subf %73, %74 : vector<1x16xf32>
    %76 = vector.extract_strided_slice %39 {offsets = [3, 0], sizes = [1, 16], strides = [1, 1]} : vector<8x16xf32> to vector<1x16xf32>
    %77 = arith.addf %75, %76 : vector<1x16xf32>
    %78 = arith.mulf %37, %72 : vector<1x16xf32>
    %79 = arith.mulf %38, %67 : vector<1x16xf32>
    %80 = arith.addf %78, %79 : vector<1x16xf32>
    %81 = vector.extract_strided_slice %40 {offsets = [3, 0], sizes = [1, 16], strides = [1, 1]} : vector<8x16xf32> to vector<1x16xf32>
    %82 = arith.addf %80, %81 : vector<1x16xf32>
    %83 = arith.mulf %37, %77 : vector<1x16xf32>
    %84 = arith.mulf %38, %82 : vector<1x16xf32>
    %85 = arith.subf %83, %84 : vector<1x16xf32>
    %86 = vector.extract_strided_slice %39 {offsets = [4, 0], sizes = [1, 16], strides = [1, 1]} : vector<8x16xf32> to vector<1x16xf32>
    %87 = arith.addf %85, %86 : vector<1x16xf32>
    %88 = arith.mulf %37, %82 : vector<1x16xf32>
    %89 = arith.mulf %38, %77 : vector<1x16xf32>
    %90 = arith.addf %88, %89 : vector<1x16xf32>
    %91 = vector.extract_strided_slice %40 {offsets = [4, 0], sizes = [1, 16], strides = [1, 1]} : vector<8x16xf32> to vector<1x16xf32>
    %92 = arith.addf %90, %91 : vector<1x16xf32>
    %93 = arith.mulf %37, %87 : vector<1x16xf32>
    %94 = arith.mulf %38, %92 : vector<1x16xf32>
    %95 = arith.subf %93, %94 : vector<1x16xf32>
    %96 = vector.extract_strided_slice %39 {offsets = [5, 0], sizes = [1, 16], strides = [1, 1]} : vector<8x16xf32> to vector<1x16xf32>
    %97 = arith.addf %95, %96 : vector<1x16xf32>
    %98 = arith.mulf %37, %92 : vector<1x16xf32>
    %99 = arith.mulf %38, %87 : vector<1x16xf32>
    %100 = arith.addf %98, %99 : vector<1x16xf32>
    %101 = vector.extract_strided_slice %40 {offsets = [5, 0], sizes = [1, 16], strides = [1, 1]} : vector<8x16xf32> to vector<1x16xf32>
    %102 = arith.addf %100, %101 : vector<1x16xf32>
    %103 = arith.mulf %37, %97 : vector<1x16xf32>
    %104 = arith.mulf %38, %102 : vector<1x16xf32>
    %105 = arith.subf %103, %104 : vector<1x16xf32>
    %106 = vector.extract_strided_slice %39 {offsets = [6, 0], sizes = [1, 16], strides = [1, 1]} : vector<8x16xf32> to vector<1x16xf32>
    %107 = arith.addf %105, %106 : vector<1x16xf32>
    %108 = arith.mulf %37, %102 : vector<1x16xf32>
    %109 = arith.mulf %38, %97 : vector<1x16xf32>
    %110 = arith.addf %108, %109 : vector<1x16xf32>
    %111 = vector.extract_strided_slice %40 {offsets = [6, 0], sizes = [1, 16], strides = [1, 1]} : vector<8x16xf32> to vector<1x16xf32>
    %112 = arith.addf %110, %111 : vector<1x16xf32>
    %113 = arith.mulf %37, %107 : vector<1x16xf32>
    %114 = arith.mulf %38, %112 : vector<1x16xf32>
    %115 = arith.subf %113, %114 : vector<1x16xf32>
    %116 = vector.extract_strided_slice %39 {offsets = [7, 0], sizes = [1, 16], strides = [1, 1]} : vector<8x16xf32> to vector<1x16xf32>
    %117 = arith.addf %115, %116 : vector<1x16xf32>
    %118 = arith.mulf %37, %112 : vector<1x16xf32>
    %119 = arith.mulf %38, %107 : vector<1x16xf32>
    %120 = arith.addf %118, %119 : vector<1x16xf32>
    %121 = vector.extract_strided_slice %40 {offsets = [7, 0], sizes = [1, 16], strides = [1, 1]} : vector<8x16xf32> to vector<1x16xf32>
    %122 = arith.addf %120, %121 : vector<1x16xf32>
    %123 = tpu.concatenate %47, %57, %67, %77, %87, %97, %107, %117 in 0 : vector<1x16xf32>, vector<1x16xf32>, vector<1x16xf32>, vector<1x16xf32>, vector<1x16xf32>, vector<1x16xf32>, vector<1x16xf32>, vector<1x16xf32> -> vector<8x16xf32>
    %124 = tpu.concatenate %52, %62, %72, %82, %92, %102, %112, %122 in 0 : vector<1x16xf32>, vector<1x16xf32>, vector<1x16xf32>, vector<1x16xf32>, vector<1x16xf32>, vector<1x16xf32>, vector<1x16xf32>, vector<1x16xf32> -> vector<8x16xf32>
    %125 = tpu.concatenate %123, %124 in 1 : vector<8x16xf32>, vector<8x16xf32> -> vector<8x32xf32>
    %c0_18 = arith.constant 0 : index
    %c0_19 = arith.constant 0 : index
    %126 = vector.load %arg3[%c0_18, %c0_19] : memref<32x16xf32, #tpu.memory_space<vmem>>, vector<32x16xf32>
    %cst_20 = arith.constant dense<0.000000e+00> : vector<8x16xf32>
    %127 = tpu.matmul %125, %126, %cst_20 {dimension_numbers = #tpu.dot_dimension_numbers<[1], [0], [0], [1], [0, 0, 1, 1], [], []>} : vector<8x32xf32>, vector<32x16xf32>, vector<8x16xf32> -> vector<8x16xf32>
    %cst_21 = arith.constant 5.000000e-01 : f32
    %128 = vector.broadcast %cst_21 : f32 to vector<8x16xf32>
    %129 = arith.mulf %128, %23 : vector<8x16xf32>
    %cst_22 = arith.constant 0.707106769 : f32
    %130 = vector.broadcast %cst_22 : f32 to vector<8x16xf32>
    %131 = arith.mulf %23, %130 : vector<8x16xf32>
    %132 = math.erf %131 : vector<8x16xf32>
    %cst_23 = arith.constant 1.000000e+00 : f32
    %133 = vector.broadcast %cst_23 : f32 to vector<8x16xf32>
    %134 = arith.addf %133, %132 : vector<8x16xf32>
    %135 = arith.mulf %129, %134 : vector<8x16xf32>
    %136 = arith.mulf %135, %127 : vector<8x16xf32>
    %c80 = arith.constant 80 : index
    %c0_24 = arith.constant 0 : index
    %137 = vector.load %arg2[%c80, %c0_24] : memref<96x32xf32, #tpu.memory_space<vmem>>, vector<16x32xf32>
    %cst_25 = arith.constant dense<0.000000e+00> : vector<8x32xf32>
    %138 = tpu.matmul %136, %137, %cst_25 {dimension_numbers = #tpu.dot_dimension_numbers<[1], [0], [0], [1], [0, 0, 1, 1], [], []>} : vector<8x16xf32>, vector<16x32xf32>, vector<8x32xf32> -> vector<8x32xf32>
    %c2 = arith.constant 2 : index
    %c0_26 = arith.constant 0 : index
    %139 = vector.load %arg4[%c2, %c0_26] : memref<4x32xf32, #tpu.memory_space<vmem>>, vector<1x32xf32>
    %140 = vector.broadcast %139 : vector<1x32xf32> to vector<8x32xf32>
    %141 = arith.addf %138, %140 : vector<8x32xf32>
    %142 = arith.addf %141, %1 : vector<8x32xf32>
    %c0_27 = arith.constant 0 : index
    %c0_28 = arith.constant 0 : index
    %c0_29 = arith.constant 0 : index
    %143 = vector.load %arg5[%c0_27, %c0_28, %c0_29] : memref<1x8x32xf32, #tpu.memory_space<vmem>>, vector<1x8x32xf32>
    %144 = vector.shape_cast %143 : vector<1x8x32xf32> to vector<8x32xf32>
    %145 = vector.shape_cast %142 : vector<8x32xf32> to vector<1x8x32xf32>
    tpu.vector_store %arg5[%c0_27, %c0_28, %c0_29], %145 {strides = array<i32>} : memref<1x8x32xf32, #tpu.memory_space<vmem>>, vector<1x8x32xf32>,
    return
  }
  func.func @transform_0(%arg0: i32) -> (i32, i32, i32) {
    %c0_i32 = arith.constant 0 : i32
    %c0_i32_0 = arith.constant 0 : i32
    %c0_i32_1 = arith.constant 0 : i32
    return %arg0, %c0_i32, %c0_i32_0 : i32, i32, i32
  }
  func.func @transform_1(%arg0: i32) -> (i32, i32) {
    %c0_i32 = arith.constant 0 : i32
    %c0_i32_0 = arith.constant 0 : i32
    %c0_i32_1 = arith.constant 0 : i32
    return %c0_i32, %c0_i32_0 : i32, i32
  }
  func.func @transform_2(%arg0: i32) -> (i32, i32) {
    %c0_i32 = arith.constant 0 : i32
    %c0_i32_0 = arith.constant 0 : i32
    %c0_i32_1 = arith.constant 0 : i32
    return %c0_i32, %c0_i32_0 : i32, i32
  }
  func.func @transform_3(%arg0: i32) -> (i32, i32) {
    %c0_i32 = arith.constant 0 : i32
    %c0_i32_0 = arith.constant 0 : i32
    %c0_i32_1 = arith.constant 0 : i32
    return %c0_i32, %c0_i32_0 : i32, i32
  }
  func.func @transform_4(%arg0: i32) -> (i32, i32, i32) {
    %c0_i32 = arith.constant 0 : i32
    %c0_i32_0 = arith.constant 0 : i32
    %c0_i32_1 = arith.constant 0 : i32
    return %arg0, %c0_i32, %c0_i32_0 : i32, i32, i32
  }
}

</mosaic_0001>

<llo_original>
// kernel: tpu_custom_call.1
$region0: #{tpu_custom_call.1}
  #allocation0 [shape = 'u32[]', space=smem, size = 0x4, offset = 0x4, fixed_abs, tag = 'smem constant byte address 0x4 - core index']
  #allocation1 [shape = 'u32[144,128]{1,0:T(1,128)}', space=vmem, size = 0x12000, scoped, tag = 'internal scratch']
  %s0 = inlined_call_operand.vmem [shape: f32[2,8,32], index: 0, kind: input, shape index: {}]
  %s1 = inlined_call_operand.vmem [shape: f32[96,32], index: 1, kind: input, shape index: {}]
  %s2 = inlined_call_operand.vmem [shape: f32[32,16], index: 2, kind: input, shape index: {}]
  %s3 = inlined_call_operand.vmem [shape: f32[4,32], index: 3, kind: input, shape index: {}]
  %s4 = inlined_call_operand.hbm [shape: f32[2,8,32], index: 4, kind: output, shape index: {}]
  %s5 = sld [smem:[#allocation0]]
  $region49: #{tpu_custom_call.1} parent=0
    _
  %s7 = ssub.s32 1, %s5
  %s8 = scalar_select 0, %s7, %s5
  $region1: #{tpu_custom_call.1} parent=0
    #allocation2 [shape = 'u8[8192]{0}', space=vmem, size = 0x2000, scoped, tag = 'output window, operand 0']
    #allocation3 [shape = 's32[2]{0}', space=sflag, size = 0x8, scoped, tag = 'scoped memory for tpu_custom_call.1']
    %9 = vsyncpa [#allocation3], 0
    %s10 = scalar_lea.sflag [#allocation3], 1
    %11 = vsyncpa %s10, 0
    loop: start=0, step=1, limit=4
    $region2: #{tpu_custom_call.1} parent=1 // loop_pre_header
      _
    $region3: #{tpu_custom_call.1} parent=1 // loop_header
      %s13 = sphi 0, %s17
      %p14 = scmp.ge.s32.totalorder %s13, 4
      %s23 = sphi 0, %s25
      %s26 = sphi 0, %s23
      %s27 = sphi 0, %s26
      %s43 = sphi 0, %s27
      %s47 = sphi 0, %s47
      %s49 = sphi 0, %s47
      %s50 = sphi 0, %s49
      %s64 = sphi 0, %s50
      %s68 = sphi 0, %s68
      %s70 = sphi 0, %s68
      %s71 = sphi 0, %s70
      %s85 = sphi 0, %s71
      %s89 = sphi 0, %s89
      %s91 = sphi 0, %s89
      %s92 = sphi 0, %s91
      %s106 = sphi 0, %s92
      %s112 = sphi 0, %s114
      %s115 = sphi 0, %s112
      %s116 = sphi 0, %s115
      %s132 = sphi 0, %s116
    $region4: #{tpu_custom_call.1} parent=1 // loop_header_branch
      %16 = sbr.rel (%p14) target = $region8
    $region5: #{tpu_custom_call.1} parent=1 // loop_body
      %s18 = ssub.s32 %s13, 1
      %s19 = ssub.s32 %s13, 2
      %s20 = sadd.s32 %s13, 1
      %s21 = ssub.s32 %s13, %s20
      %p22 = scmp.eq.s32.totalorder %s21, 0
      %s24 = sadd.s32 %s23, 1
      %s25 = scalar_select %p22, %s23, %s24
      %p28 = pneg %p22
      %p29 = scmp.eq.s32.totalorder %s13, 1
      %p30 = por %p28, %p29
      %p31 = scmp.ne.s32.totalorder %s23, %s26
      %p32 = scmp.eq.s32.totalorder %s13, 0
      %p33 = por %p31, %p32
      %p34 = scmp.ne.s32.totalorder %s23, %s26
      %p35 = scmp.eq.s32.totalorder %s18, 1
      %p36 = por %p34, %p35
      %p37 = scmp.ne.s32.totalorder %s26, %s27
      %p38 = scmp.eq.s32.totalorder %s18, 0
      %p39 = por %p37, %p38
      %p40 = scmp.ne.s32.totalorder %s26, %s27
      %p41 = scmp.eq.s32.totalorder %s19, 1
      %p42 = por %p40, %p41
      %p44 = scmp.ne.s32.totalorder %s27, %s43
      %p45 = scmp.eq.s32.totalorder %s19, 0
      %p46 = por %p44, %p45
      %s48 = sadd.s32 %s47, 1
      %p51 = scmp.eq.s32.totalorder %s13, 1
      %p52 = scmp.ne.s32.totalorder %s47, %s49
      %p53 = scmp.eq.s32.totalorder %s13, 0
      %p54 = por %p52, %p53
      %p55 = scmp.ne.s32.totalorder %s47, %s49
      %p56 = scmp.eq.s32.totalorder %s18, 1
      %p57 = por %p55, %p56
      %p58 = scmp.ne.s32.totalorder %s49, %s50
      %p59 = scmp.eq.s32.totalorder %s18, 0
      %p60 = por %p58, %p59
      %p61 = scmp.ne.s32.totalorder %s49, %s50
      %p62 = scmp.eq.s32.totalorder %s19, 1
      %p63 = por %p61, %p62
      %p65 = scmp.ne.s32.totalorder %s50, %s64
      %p66 = scmp.eq.s32.totalorder %s19, 0
      %p67 = por %p65, %p66
      %s69 = sadd.s32 %s68, 1
      %p72 = scmp.eq.s32.totalorder %s13, 1
      %p73 = scmp.ne.s32.totalorder %s68, %s70
      %p74 = scmp.eq.s32.totalorder %s13, 0
      %p75 = por %p73, %p74
      %p76 = scmp.ne.s32.totalorder %s68, %s70
      %p77 = scmp.eq.s32.totalorder %s18, 1
      %p78 = por %p76, %p77
      %p79 = scmp.ne.s32.totalorder %s70, %s71
      %p80 = scmp.eq.s32.totalorder %s18, 0
      %p81 = por %p79, %p80
      %p82 = scmp.ne.s32.totalorder %s70, %s71
      %p83 = scmp.eq.s32.totalorder %s19, 1
      %p84 = por %p82, %p83
      %p86 = scmp.ne.s32.totalorder %s71, %s85
      %p87 = scmp.eq.s32.totalorder %s19, 0
      %p88 = por %p86, %p87
      %s90 = sadd.s32 %s89, 1
      %p93 = scmp.eq.s32.totalorder %s13, 1
      %p94 = scmp.ne.s32.totalorder %s89, %s91
      %p95 = scmp.eq.s32.totalorder %s13, 0
      %p96 = por %p94, %p95
      %p97 = scmp.ne.s32.totalorder %s89, %s91
      %p98 = scmp.eq.s32.totalorder %s18, 1
      %p99 = por %p97, %p98
      %p100 = scmp.ne.s32.totalorder %s91, %s92
      %p101 = scmp.eq.s32.totalorder %s18, 0
      %p102 = por %p100, %p101
      %p103 = scmp.ne.s32.totalorder %s91, %s92
      %p104 = scmp.eq.s32.totalorder %s19, 1
      %p105 = por %p103, %p104
      %p107 = scmp.ne.s32.totalorder %s92, %s106
      %p108 = scmp.eq.s32.totalorder %s19, 0
      %p109 = por %p107, %p108
      %s110 = ssub.s32 %s13, %s20
      %p111 = scmp.eq.s32.totalorder %s110, 0
      %s113 = sadd.s32 %s112, 1
      %s114 = scalar_select %p111, %s112, %s113
      %p117 = pneg %p111
      %p118 = scmp.eq.s32.totalorder %s13, 1
      %p119 = por %p117, %p118
      %p120 = scmp.ne.s32.totalorder %s112, %s115
      %p121 = scmp.eq.s32.totalorder %s13, 0
      %p122 = por %p120, %p121
      %p123 = scmp.ne.s32.totalorder %s112, %s115
      %p124 = scmp.eq.s32.totalorder %s18, 1
      %p125 = por %p123, %p124
      %p126 = scmp.ne.s32.totalorder %s115, %s116
      %p127 = scmp.eq.s32.totalorder %s18, 0
      %p128 = por %p126, %p127
      %p129 = scmp.ne.s32.totalorder %s115, %s116
      %p130 = scmp.eq.s32.totalorder %s19, 1
      %p131 = por %p129, %p130
      %p133 = scmp.ne.s32.totalorder %s116, %s132
      %p134 = scmp.eq.s32.totalorder %s19, 0
      %p135 = por %p133, %p134
      %p136 = scmp.le.s32.totalorder 1, %s13
      %p137 = scmp.lt.s32.totalorder %s13, 3
      %p138 = pnand %p136, %p137
      %p139 = pneg %p138
      // Predicated region
      $region9: #{tpu_custom_call.1} parent=5 // pred_check
        _
      $region10: #{tpu_custom_call.1} parent=5 // pred_check_branch
        %141 = sbr.rel (%p138) target = $region12
      $region11: #{tpu_custom_call.1} parent=5 // pred_region
        %s142 = ssub.s32 %s13, 1
        // Predicated region
        $region13: #{tpu_custom_call.1} parent=11 // pred_check
          %p143 = pneg %p60
        $region14: #{tpu_custom_call.1} parent=11 // pred_check_branch
          %145 = sbr.rel (%p143) target = $region16
        $region15: #{tpu_custom_call.1} parent=11 // pred_region
          _
        $region16: #{tpu_custom_call.1} parent=11 // pred_fallthru
          _
        // Predicated region
        $region17: #{tpu_custom_call.1} parent=11 // pred_check
          %p146 = pneg %p81
        $region18: #{tpu_custom_call.1} parent=11 // pred_check_branch
          %148 = sbr.rel (%p146) target = $region20
        $region19: #{tpu_custom_call.1} parent=11 // pred_region
          _
        $region20: #{tpu_custom_call.1} parent=11 // pred_fallthru
          _
        // Predicated region
        $region21: #{tpu_custom_call.1} parent=11 // pred_check
          %p149 = pneg %p102
        $region22: #{tpu_custom_call.1} parent=11 // pred_check_branch
          %151 = sbr.rel (%p149) target = $region24
        $region23: #{tpu_custom_call.1} parent=11 // pred_region
          _
        $region24: #{tpu_custom_call.1} parent=11 // pred_fallthru
          _
      $region12: #{tpu_custom_call.1} parent=5 // pred_fallthru
        _
      %p152 = scmp.lt.s32.totalorder %s13, 2
      // Predicated region
      $region25: #{tpu_custom_call.1} parent=5 // pred_check
        %p153 = pneg %p152
      $region26: #{tpu_custom_call.1} parent=5 // pred_check_branch
        %155 = sbr.rel (%p153) target = $region28
      $region27: #{tpu_custom_call.1} parent=5 // pred_region
        // Predicated region
        $region29: #{tpu_custom_call.1} parent=27 // pred_check
          %p156 = pneg %p33
        $region30: #{tpu_custom_call.1} parent=27 // pred_check_branch
          %158 = sbr.rel (%p156) target = $region32
        $region31: #{tpu_custom_call.1} parent=27 // pred_region
          %p159 = scmp.lt.s32.totalorder %s13, 1
          %s160 = scalar_select %p159, %s13, 1
          %s161 = smul.addr %s160, 8
          %s162 = scalar_lea.vmem %s0, %s161
        $region32: #{tpu_custom_call.1} parent=27 // pred_fallthru
          _
      $region28: #{tpu_custom_call.1} parent=5 // pred_fallthru
        _
      %p163 = scmp.le.s32.totalorder 1, %s13
      %p164 = scmp.lt.s32.totalorder %s13, 3
      %p165 = pnand %p163, %p164
      %p166 = pneg %p165
      // Predicated region
      $region33: #{tpu_custom_call.1} parent=5 // pred_check
        _
      $region34: #{tpu_custom_call.1} parent=5 // pred_check_branch
        %168 = sbr.rel (%p165) target = $region36
      $region35: #{tpu_custom_call.1} parent=5 // pred_region
        %s169 = ssub.s32 %s13, 1
        %p170 = scmp.lt.s32.totalorder %s18, 1
        %s171 = scalar_select %p170, %s18, 1
        %s172 = smul.addr %s171, 8
        %s173 = scalar_lea.vmem %s0, %s172
        %p174 = pneg %p39
        %p175 = pneg %p36
        %p176 = pneg %p60
        %p177 = pneg %p57
        %p178 = pneg %p81
        %p179 = pneg %p78
        %p180 = pneg %p102
        %p181 = pneg %p99
        %p182 = pneg %p128
        %p183 = pneg %p125
        %s184 = sand.u32 %s115, 1
        %s185 = scalar_lea.sflag [#allocation3], %s184
        %s186 = sand.u32 %s115, 1
        %s187 = smul.addr %s186, 8
        %s188 = scalar_lea.vmem [#allocation2], %s187
        %p189 = scmp.lt.s32.totalorder %s18, 1
        %s190 = scalar_select %p189, %s18, 1
        %s191 = smul.addr %s190, 8
        %s192 = scalar_lea.vmem %s0, %s191
        %v193 = vld [vmem:[%s192] sm:$0xff]
        %vm194 = vcmask 261120
        %v195 = vsel %vm194, %v193, 0.0
        %196 = vadd.xlane.f32.xlu0 %v195
        %v197 = vpop.xlane.xlu0 %196
        %v198 = vrcp.pop 32.0
        %v199 = vmul.f32 %v197, %v198
        %v200 = vsub.f32 %v193, %v199
        %v201 = vmul.f32 %v200, %v200
        %v202 = vsel %vm194, %v201, 0.0
        %203 = vadd.xlane.f32.xlu0 %v202
        %v204 = vpop.xlane.xlu0 %203
        %v205 = vmul.f32 %v204, %v198
        %v206 = vadd.f32 %v205, 1e-05
        %v207 = vrsqrt.pop %v206
        %v208 = vmul.f32 %v200, %v207
        %v209 = vld [vmem:[%s1] sm:$0xff]
        %v210 = vld [vmem:[%s1 + $0x8] sm:$0xff]
        %v211 = vld [vmem:[%s1 + $0x10] sm:$0xff]
        %v212 = vld [vmem:[%s1 + $0x18] sm:$0xff]
        %v213 = vld [vmem:[%s3] sm:$0x1]
        %v214 = vlaneseq
        %v215 = vshrl.u32 %v214, 7
        %v216 = vsub.s32 0, %v215
        %v217 = vrot.slane %v213, %v216
        %v219 = vsel %vm194, %v208, 0
        %221 = vmatprep.subr.mxu0 0.0
        %222 = vmatpush1.msra.mxu0 %v209
        %223 = vmatprep.subr.mxu0 0.0
        %224 = vmatpush1.msra.mxu0 %v210
        %225 = vmatprep.subr.mxu0 0.0
        %226 = vmatpush1.msra.mxu0 %v211
        %227 = vmatprep.subr.mxu0 0.0
        %228 = vmatpush1.msra.mxu0 %v212
        %229 = vmatprep.subr.mxu0 0.0
        %230 = vmatpush1.msra.mxu0 0.0
        %231 = vmatprep.subr.mxu0 0.0
        %232 = vmatpush1.msra.mxu0 0.0
        %233 = vmatprep.subr.mxu0 0.0
        %234 = vmatpush1.msra.mxu0 0.0
        %235 = vmatprep.subr.mxu0 0.0
        %236 = vmatpush1.msra.mxu0 0.0
        %237 = vmatprep.subr.mxu0 0.0
        %238 = vmatpush1.msra.mxu0 0.0
        %239 = vmatprep.subr.mxu0 0.0
        %240 = vmatpush1.msra.mxu0 0.0
        %241 = vmatprep.subr.mxu0 0.0
        %242 = vmatpush1.msra.mxu0 0.0
        %243 = vmatprep.subr.mxu0 0.0
        %244 = vmatpush1.msra.mxu0 0.0
        %245 = vmatprep.subr.mxu0 0.0
        %246 = vmatpush1.msra.mxu0 0.0
        %247 = vmatprep.subr.mxu0 0.0
        %248 = vmatpush1.msra.mxu0 0.0
        %249 = vmatprep.subr.mxu0 0.0
        %250 = vmatpush1.msra.mxu0 0.0
        %251 = vmatprep.subr.mxu0 0.0
        %252 = vmatpush1.msra.mxu0 0.0
        %253 = vmatprep.subr.mxu0 0.0
        %254 = vmatpush1.msra.mxu0 0.0
        %255 = vmatprep.subr.mxu0 0.0
        %256 = vmatpush1.msra.mxu0 0.0
        %257 = vmatprep.subr.mxu0 0.0
        %258 = vmatpush1.msra.mxu0 0.0
        %259 = vmatprep.subr.mxu0 0.0
        %260 = vmatpush1.msra.mxu0 0.0
        %261 = vmatprep.subr.mxu0 0.0
        %262 = vmatpush1.msra.mxu0 0.0
        %263 = vmatprep.subr.mxu0 0.0
        %264 = vmatpush1.msra.mxu0 0.0
        %265 = vmatprep.subr.mxu0 0.0
        %266 = vmatpush1.msra.mxu0 0.0
        %267 = vmatprep.subr.mxu0 0.0
        %268 = vmatpush1.msra.mxu0 0.0
        %269 = vmatprep.subr.mxu0 0.0
        %270 = vmatpush1.msra.mxu0 0.0
        %271 = vmatprep.subr.mxu0 0.0
        %272 = vmatpush1.msra.mxu0 0.0
        %273 = vmatprep.subr.mxu0 0.0
        %274 = vmatpush1.msra.mxu0 0.0
        %275 = vmatprep.subr.mxu0 0.0
        %276 = vmatpush1.msra.mxu0 0.0
        %277 = vmatprep.subr.mxu0 0.0
        %278 = vmatpush1.msra.mxu0 0.0
        %279 = vmatprep.subr.mxu0 0.0
        %280 = vmatpush1.msra.mxu0 0.0
        %281 = vmatprep.subr.mxu0 0.0
        %282 = vmatpush1.msra.mxu0 0.0
        %283 = vmatprep.subr.mxu0 0.0
        %284 = vmatpush1.msra.mxu0 0.0
        %285 = vmatprep.mubr.f32.mxu0 0.0
        %286 = vmatmul.mubr.f32.gmra.mrb[0].mxu0 %v219
        %v287 = vpop.f32.mrb[0].mxu0
        %v288 = vadd.f32 %v217, %v287
        %v289 = vpop.f32.mrb[0].mxu0
        %290 = vdwg.mxu0
        %v292 = vrot.slane %v288, 7
        %293 = vrot.lane.b32.xlu0 %v292, 112
        %v294 = vpop.permute.xlu0 %293
        %vm296 = vcmask 1040384
        %v297 = vsel %vm296, 0.0, %v294
        %v298 = vsel %vm296, %v294, 0.0
        %vm301 = vcmask 1046528
        %v302 = vrot.slane %v297, 1
        %v303 = vrot.slane %v298, 1
        %v304 = vsel %vm301, %v302, %v303
        %305 = vrot.lane.b32.xlu0 %v304, 16
        %v306 = vpop.permute.xlu0 %305
        %vm308 = vcmask 1045504
        %v309 = vrot.slane %v297, 2
        %v310 = vrot.slane %v298, 2
        %v311 = vsel %vm308, %v309, %v310
        %312 = vrot.lane.b32.xlu0 %v311, 32
        %v313 = vpop.permute.xlu0 %312
        %vm315 = vcmask 130048
        %v316 = vsel %vm315, %v297, %v306
        %v317 = vsel %vm194, %v316, %v313
        %v318 = vld [vmem:[%s1 + $0x20] sm:$0xff]
        %v319 = vld [vmem:[%s1 + $0x28] sm:$0xff]
        %v320 = vld [vmem:[%s1 + $0x30] sm:$0xff]
        %v321 = vld [vmem:[%s1 + $0x38] sm:$0xff]
        %v322 = vld [vmem:[%s1 + $0x40] sm:$0xff]
        %v323 = vld [vmem:[%s1 + $0x48] sm:$0xff]
        %v324 = vld [vmem:[%s3 + $0x1] sm:$0x1]
        %v325 = vlaneseq
        %v326 = vshrl.u32 %v325, 7
        %v327 = vsub.s32 0, %v326
        %v328 = vrot.slane %v324, %v327
        %vm329 = vcmask 392192
        %v331 = vsel %vm329, %v317, 0
        %333 = vmatprep.subr.mxu0 0.0
        %334 = vmatpush1.msra.mxu0 %v318
        %335 = vmatprep.subr.mxu0 0.0
        %336 = vmatpush1.msra.mxu0 %v319
        %337 = vmatprep.subr.mxu0 0.0
        %338 = vmatpush1.msra.mxu0 %v320
        %339 = vmatprep.subr.mxu0 0.0
        %340 = vmatpush1.msra.mxu0 %v321
        %341 = vmatprep.subr.mxu0 0.0
        %342 = vmatpush1.msra.mxu0 %v322
        %343 = vmatprep.subr.mxu0 0.0
        %344 = vmatpush1.msra.mxu0 %v323
        %345 = vmatprep.subr.mxu0 0.0
        %346 = vmatpush1.msra.mxu0 0.0
        %347 = vmatprep.subr.mxu0 0.0
        %348 = vmatpush1.msra.mxu0 0.0
        %349 = vmatprep.subr.mxu0 0.0
        %350 = vmatpush1.msra.mxu0 0.0
        %351 = vmatprep.subr.mxu0 0.0
        %352 = vmatpush1.msra.mxu0 0.0
        %353 = vmatprep.subr.mxu0 0.0
        %354 = vmatpush1.msra.mxu0 0.0
        %355 = vmatprep.subr.mxu0 0.0
        %356 = vmatpush1.msra.mxu0 0.0
        %357 = vmatprep.subr.mxu0 0.0
        %358 = vmatpush1.msra.mxu0 0.0
        %359 = vmatprep.subr.mxu0 0.0
        %360 = vmatpush1.msra.mxu0 0.0
        %361 = vmatprep.subr.mxu0 0.0
        %362 = vmatpush1.msra.mxu0 0.0
        %363 = vmatprep.subr.mxu0 0.0
        %364 = vmatpush1.msra.mxu0 0.0
        %365 = vmatprep.subr.mxu0 0.0
        %366 = vmatpush1.msra.mxu0 0.0
        %367 = vmatprep.subr.mxu0 0.0
        %368 = vmatpush1.msra.mxu0 0.0
        %369 = vmatprep.subr.mxu0 0.0
        %370 = vmatpush1.msra.mxu0 0.0
        %371 = vmatprep.subr.mxu0 0.0
        %372 = vmatpush1.msra.mxu0 0.0
        %373 = vmatprep.subr.mxu0 0.0
        %374 = vmatpush1.msra.mxu0 0.0
        %375 = vmatprep.subr.mxu0 0.0
        %376 = vmatpush1.msra.mxu0 0.0
        %377 = vmatprep.subr.mxu0 0.0
        %378 = vmatpush1.msra.mxu0 0.0
        %379 = vmatprep.subr.mxu0 0.0
        %380 = vmatpush1.msra.mxu0 0.0
        %381 = vmatprep.subr.mxu0 0.0
        %382 = vmatpush1.msra.mxu0 0.0
        %383 = vmatprep.subr.mxu0 0.0
        %384 = vmatpush1.msra.mxu0 0.0
        %385 = vmatprep.subr.mxu0 0.0
        %386 = vmatpush1.msra.mxu0 0.0
        %387 = vmatprep.subr.mxu0 0.0
        %388 = vmatpush1.msra.mxu0 0.0
        %389 = vmatprep.subr.mxu0 0.0
        %390 = vmatpush1.msra.mxu0 0.0
        %391 = vmatprep.subr.mxu0 0.0
        %392 = vmatpush1.msra.mxu0 0.0
        %393 = vmatprep.subr.mxu0 0.0
        %394 = vmatpush1.msra.mxu0 0.0
        %395 = vmatprep.subr.mxu0 0.0
        %396 = vmatpush1.msra.mxu0 0.0
        %397 = vmatprep.mubr.f32.mxu0 0.0
        %398 = vmatmul.mubr.f32.gmra.mrb[0].mxu0 %v331
        %v399 = vpop.f32.mrb[0].mxu0
        %v400 = vadd.f32 %v328, %v399
        %v401 = vpop.f32.mrb[0].mxu0
        %402 = vdwg.mxu0
        %v403 = vld [vmem:[%s3 + $0x3] sm:$0x1]
        %v404 = vmul.f32 %v403, 0.0
        %406 = vrot.lane.b32.xlu0 %v404, 112
        %v407 = vpop.permute.xlu0 %406
        %v409 = vsub.f32 %v404, %v407
        %v410 = vadd.f32 %v409, %v400
        %v411 = vadd.f32 %v404, %v407
        %413 = vrot.lane.b32.xlu0 %v400, 112
        %v414 = vpop.permute.xlu0 %413
        %v416 = vadd.f32 %v411, %v414
        %v417 = vmul.f32 %v403, %v410
        %419 = vrot.lane.b32.xlu0 %v416, 16
        %v420 = vpop.permute.xlu0 %419
        %v422 = vmul.f32 %v403, %v420
        %424 = vrot.lane.b32.xlu0 %v422, 112
        %v425 = vpop.permute.xlu0 %424
        %v427 = vsub.f32 %v417, %v425
        %v428 = vrot.slane %v400, 1
        %v430 = vadd.f32 %v427, %v428
        %v431 = vmul.f32 %v403, %v416
        %433 = vrot.lane.b32.xlu0 %v410, 16
        %v434 = vpop.permute.xlu0 %433
        %v436 = vmul.f32 %v403, %v434
        %438 = vrot.lane.b32.xlu0 %v436, 112
        %v439 = vpop.permute.xlu0 %438
        %v441 = vadd.f32 %v431, %v439
        %442 = vrot.lane.b32.xlu0 %v428, 112
        %v443 = vpop.permute.xlu0 %442
        %v445 = vadd.f32 %v441, %v443
        %v446 = vmul.f32 %v403, %v430
        %448 = vrot.lane.b32.xlu0 %v445, 16
        %v449 = vpop.permute.xlu0 %448
        %v451 = vmul.f32 %v403, %v449
        %453 = vrot.lane.b32.xlu0 %v451, 112
        %v454 = vpop.permute.xlu0 %453
        %v456 = vsub.f32 %v446, %v454
        %v457 = vrot.slane %v400, 2
        %v459 = vadd.f32 %v456, %v457
        %v460 = vmul.f32 %v403, %v445
        %462 = vrot.lane.b32.xlu0 %v430, 16
        %v463 = vpop.permute.xlu0 %462
        %v465 = vmul.f32 %v403, %v463
        %467 = vrot.lane.b32.xlu0 %v465, 112
        %v468 = vpop.permute.xlu0 %467
        %v470 = vadd.f32 %v460, %v468
        %471 = vrot.lane.b32.xlu0 %v457, 112
        %v472 = vpop.permute.xlu0 %471
        %v474 = vadd.f32 %v470, %v472
        %v475 = vmul.f32 %v403, %v459
        %477 = vrot.lane.b32.xlu0 %v474, 16
        %v478 = vpop.permute.xlu0 %477
        %v480 = vmul.f32 %v403, %v478
        %482 = vrot.lane.b32.xlu0 %v480, 112
        %v483 = vpop.permute.xlu0 %482
        %v485 = vsub.f32 %v475, %v483
        %v486 = vrot.slane %v400, 3
        %v488 = vadd.f32 %v485, %v486
        %v489 = vmul.f32 %v403, %v474
        %491 = vrot.lane.b32.xlu0 %v459, 16
        %v492 = vpop.permute.xlu0 %491
        %v494 = vmul.f32 %v403, %v492
        %496 = vrot.lane.b32.xlu0 %v494, 112
        %v497 = vpop.permute.xlu0 %496
        %v499 = vadd.f32 %v489, %v497
        %500 = vrot.lane.b32.xlu0 %v486, 112
        %v501 = vpop.permute.xlu0 %500
        %v503 = vadd.f32 %v499, %v501
        %v504 = vmul.f32 %v403, %v488
        %506 = vrot.lane.b32.xlu0 %v503, 16
        %v507 = vpop.permute.xlu0 %506
        %v509 = vmul.f32 %v403, %v507
        %511 = vrot.lane.b32.xlu0 %v509, 112
        %v512 = vpop.permute.xlu0 %511
        %v514 = vsub.f32 %v504, %v512
        %v515 = vrot.slane %v400, 4
        %v517 = vadd.f32 %v514, %v515
        %v518 = vmul.f32 %v403, %v503
        %520 = vrot.lane.b32.xlu0 %v488, 16
        %v521 = vpop.permute.xlu0 %520
        %v523 = vmul.f32 %v403, %v521
        %525 = vrot.lane.b32.xlu0 %v523, 112
        %v526 = vpop.permute.xlu0 %525
        %v528 = vadd.f32 %v518, %v526
        %529 = vrot.lane.b32.xlu0 %v515, 112
        %v530 = vpop.permute.xlu0 %529
        %v532 = vadd.f32 %v528, %v530
        %v533 = vmul.f32 %v403, %v517
        %535 = vrot.lane.b32.xlu0 %v532, 16
        %v536 = vpop.permute.xlu0 %535
        %v538 = vmul.f32 %v403, %v536
        %540 = vrot.lane.b32.xlu0 %v538, 112
        %v541 = vpop.permute.xlu0 %540
        %v543 = vsub.f32 %v533, %v541
        %v544 = vrot.slane %v400, 5
        %v546 = vadd.f32 %v543, %v544
        %v547 = vmul.f32 %v403, %v532
        %549 = vrot.lane.b32.xlu0 %v517, 16
        %v550 = vpop.permute.xlu0 %549
        %v552 = vmul.f32 %v403, %v550
        %554 = vrot.lane.b32.xlu0 %v552, 112
        %v555 = vpop.permute.xlu0 %554
        %v557 = vadd.f32 %v547, %v555
        %558 = vrot.lane.b32.xlu0 %v544, 112
        %v559 = vpop.permute.xlu0 %558
        %v561 = vadd.f32 %v557, %v559
        %v562 = vmul.f32 %v403, %v546
        %564 = vrot.lane.b32.xlu0 %v561, 16
        %v565 = vpop.permute.xlu0 %564
        %v567 = vmul.f32 %v403, %v565
        %569 = vrot.lane.b32.xlu0 %v567, 112
        %v570 = vpop.permute.xlu0 %569
        %v572 = vsub.f32 %v562, %v570
        %v573 = vrot.slane %v400, 6
        %v575 = vadd.f32 %v572, %v573
        %v576 = vmul.f32 %v403, %v561
        %578 = vrot.lane.b32.xlu0 %v546, 16
        %v579 = vpop.permute.xlu0 %578
        %v581 = vmul.f32 %v403, %v579
        %583 = vrot.lane.b32.xlu0 %v581, 112
        %v584 = vpop.permute.xlu0 %583
        %v586 = vadd.f32 %v576, %v584
        %587 = vrot.lane.b32.xlu0 %v573, 112
        %v588 = vpop.permute.xlu0 %587
        %v590 = vadd.f32 %v586, %v588
        %v591 = vmul.f32 %v403, %v575
        %593 = vrot.lane.b32.xlu0 %v590, 16
        %v594 = vpop.permute.xlu0 %593
        %v596 = vmul.f32 %v403, %v594
        %598 = vrot.lane.b32.xlu0 %v596, 112
        %v599 = vpop.permute.xlu0 %598
        %v601 = vsub.f32 %v591, %v599
        %v602 = vrot.slane %v400, 7
        %v604 = vadd.f32 %v601, %v602
        %v605 = vmul.f32 %v403, %v590
        %607 = vrot.lane.b32.xlu0 %v575, 16
        %v608 = vpop.permute.xlu0 %607
        %v610 = vmul.f32 %v403, %v608
        %612 = vrot.lane.b32.xlu0 %v610, 112
        %v613 = vpop.permute.xlu0 %612
        %v615 = vadd.f32 %v605, %v613
        %616 = vrot.lane.b32.xlu0 %v602, 112
        %v617 = vpop.permute.xlu0 %616
        %v619 = vadd.f32 %v615, %v617
        %v620 = vrot.slane %v430, 7
        %v622 = vrot.slane %v459, 6
        %v624 = vrot.slane %v488, 5
        %v626 = vrot.slane %v517, 4
        %v628 = vrot.slane %v546, 3
        %v630 = vrot.slane %v575, 2
        %v633 = vrot.slane %v604, 1
        %v635 = vsel %vm296, %v410, %v620
        %vm636 = vcmask 1041408
        %v637 = vsel %vm636, %v635, %v622
        %vm638 = vcmask 1042432
        %v639 = vsel %vm638, %v637, %v624
        %vm640 = vcmask 1043456
        %v641 = vsel %vm640, %v639, %v626
        %vm642 = vcmask 1044480
        %v643 = vsel %vm642, %v641, %v628
        %v644 = vsel %vm308, %v643, %v630
        %v645 = vsel %vm301, %v644, %v633
        %v646 = vrot.slane %v445, 7
        %v648 = vrot.slane %v474, 6
        %v650 = vrot.slane %v503, 5
        %v652 = vrot.slane %v532, 4
        %v654 = vrot.slane %v561, 3
        %v656 = vrot.slane %v590, 2
        %v659 = vrot.slane %v619, 1
        %v661 = vsel %vm296, %v416, %v646
        %v662 = vsel %vm636, %v661, %v648
        %v663 = vsel %vm638, %v662, %v650
        %v664 = vsel %vm640, %v663, %v652
        %v665 = vsel %vm642, %v664, %v654
        %v666 = vsel %vm308, %v665, %v656
        %v667 = vsel %vm301, %v666, %v659
        %669 = vrot.lane.b32.xlu0 %v667, 16
        %v670 = vpop.permute.xlu0 %669
        %v672 = vsel %vm315, %v645, %v670
        %v673 = vld [vmem:[%s2] sm:$0xff]
        %v674 = vld [vmem:[%s2 + $0x8] sm:$0xff]
        %v675 = vld [vmem:[%s2 + $0x10] sm:$0xff]
        %v676 = vld [vmem:[%s2 + $0x18] sm:$0xff]
        %v678 = vsel %vm194, %v672, 0
        %680 = vmatprep.subr.mxu0 0.0
        %681 = vmatpush1.msra.mxu0 %v673
        %682 = vmatprep.subr.mxu0 0.0
        %683 = vmatpush1.msra.mxu0 %v674
        %684 = vmatprep.subr.mxu0 0.0
        %685 = vmatpush1.msra.mxu0 %v675
        %686 = vmatprep.subr.mxu0 0.0
        %687 = vmatpush1.msra.mxu0 %v676
        %688 = vmatprep.subr.mxu0 0.0
        %689 = vmatpush1.msra.mxu0 0.0
        %690 = vmatprep.subr.mxu0 0.0
        %691 = vmatpush1.msra.mxu0 0.0
        %692 = vmatprep.subr.mxu0 0.0
        %693 = vmatpush1.msra.mxu0 0.0
        %694 = vmatprep.subr.mxu0 0.0
        %695 = vmatpush1.msra.mxu0 0.0
        %696 = vmatprep.subr.mxu0 0.0
        %697 = vmatpush1.msra.mxu0 0.0
        %698 = vmatprep.subr.mxu0 0.0
        %699 = vmatpush1.msra.mxu0 0.0
        %700 = vmatprep.subr.mxu0 0.0
        %701 = vmatpush1.msra.mxu0 0.0
        %702 = vmatprep.subr.mxu0 0.0
        %703 = vmatpush1.msra.mxu0 0.0
        %704 = vmatprep.subr.mxu0 0.0
        %705 = vmatpush1.msra.mxu0 0.0
        %706 = vmatprep.subr.mxu0 0.0
        %707 = vmatpush1.msra.mxu0 0.0
        %708 = vmatprep.subr.mxu0 0.0
        %709 = vmatpush1.msra.mxu0 0.0
        %710 = vmatprep.subr.mxu0 0.0
        %711 = vmatpush1.msra.mxu0 0.0
        %712 = vmatprep.subr.mxu0 0.0
        %713 = vmatpush1.msra.mxu0 0.0
        %714 = vmatprep.subr.mxu0 0.0
        %715 = vmatpush1.msra.mxu0 0.0
        %716 = vmatprep.subr.mxu0 0.0
        %717 = vmatpush1.msra.mxu0 0.0
        %718 = vmatprep.subr.mxu0 0.0
        %719 = vmatpush1.msra.mxu0 0.0
        %720 = vmatprep.subr.mxu0 0.0
        %721 = vmatpush1.msra.mxu0 0.0
        %722 = vmatprep.subr.mxu0 0.0
        %723 = vmatpush1.msra.mxu0 0.0
        %724 = vmatprep.subr.mxu0 0.0
        %725 = vmatpush1.msra.mxu0 0.0
        %726 = vmatprep.subr.mxu0 0.0
        %727 = vmatpush1.msra.mxu0 0.0
        %728 = vmatprep.subr.mxu0 0.0
        %729 = vmatpush1.msra.mxu0 0.0
        %730 = vmatprep.subr.mxu0 0.0
        %731 = vmatpush1.msra.mxu0 0.0
        %732 = vmatprep.subr.mxu0 0.0
        %733 = vmatpush1.msra.mxu0 0.0
        %734 = vmatprep.subr.mxu0 0.0
        %735 = vmatpush1.msra.mxu0 0.0
        %736 = vmatprep.subr.mxu0 0.0
        %737 = vmatpush1.msra.mxu0 0.0
        %738 = vmatprep.subr.mxu0 0.0
        %739 = vmatpush1.msra.mxu0 0.0
        %740 = vmatprep.subr.mxu0 0.0
        %741 = vmatpush1.msra.mxu0 0.0
        %742 = vmatprep.subr.mxu0 0.0
        %743 = vmatpush1.msra.mxu0 0.0
        %744 = vmatprep.mubr.f32.mxu0 0.0
        %745 = vmatmul.mubr.f32.gmra.mrb[0].mxu0 %v678
        %v746 = vpop.f32.mrb[0].mxu0
        %v747 = vadd.f32 0.0, %v746
        %v748 = vpop.f32.mrb[0].mxu0
        %749 = vdwg.mxu0
        %v750 = vmul.f32 %v288, 0.5
        %v751 = vmul.f32 %v288, 0.70710677
        %v752 = verf.f32.pop %v751
        %v753 = vadd.f32 %v752, 1.0
        %v754 = vmul.f32 %v750, %v753
        %v755 = vmul.f32 %v754, %v747
        %v756 = vld [vmem:[%s1 + $0x50] sm:$0xff]
        %v757 = vld [vmem:[%s1 + $0x58] sm:$0xff]
        %v758 = vld [vmem:[%s3 + $0x2] sm:$0x1]
        %v759 = vlaneseq
        %v760 = vshrl.u32 %v759, 7
        %v761 = vsub.s32 0, %v760
        %v762 = vrot.slane %v758, %v761
        %v764 = vsel %vm315, %v755, 0
        %766 = vmatprep.subr.mxu0 0.0
        %767 = vmatpush1.msra.mxu0 %v756
        %768 = vmatprep.subr.mxu0 0.0
        %769 = vmatpush1.msra.mxu0 %v757
        %770 = vmatprep.subr.mxu0 0.0
        %771 = vmatpush1.msra.mxu0 0.0
        %772 = vmatprep.subr.mxu0 0.0
        %773 = vmatpush1.msra.mxu0 0.0
        %774 = vmatprep.subr.mxu0 0.0
        %775 = vmatpush1.msra.mxu0 0.0
        %776 = vmatprep.subr.mxu0 0.0
        %777 = vmatpush1.msra.mxu0 0.0
        %778 = vmatprep.subr.mxu0 0.0
        %779 = vmatpush1.msra.mxu0 0.0
        %780 = vmatprep.subr.mxu0 0.0
        %781 = vmatpush1.msra.mxu0 0.0
        %782 = vmatprep.subr.mxu0 0.0
        %783 = vmatpush1.msra.mxu0 0.0
        %784 = vmatprep.subr.mxu0 0.0
        %785 = vmatpush1.msra.mxu0 0.0
        %786 = vmatprep.subr.mxu0 0.0
        %787 = vmatpush1.msra.mxu0 0.0
        %788 = vmatprep.subr.mxu0 0.0
        %789 = vmatpush1.msra.mxu0 0.0
        %790 = vmatprep.subr.mxu0 0.0
        %791 = vmatpush1.msra.mxu0 0.0
        %792 = vmatprep.subr.mxu0 0.0
        %793 = vmatpush1.msra.mxu0 0.0
        %794 = vmatprep.subr.mxu0 0.0
        %795 = vmatpush1.msra.mxu0 0.0
        %796 = vmatprep.subr.mxu0 0.0
        %797 = vmatpush1.msra.mxu0 0.0
        %798 = vmatprep.subr.mxu0 0.0
        %799 = vmatpush1.msra.mxu0 0.0
        %800 = vmatprep.subr.mxu0 0.0
        %801 = vmatpush1.msra.mxu0 0.0
        %802 = vmatprep.subr.mxu0 0.0
        %803 = vmatpush1.msra.mxu0 0.0
        %804 = vmatprep.subr.mxu0 0.0
        %805 = vmatpush1.msra.mxu0 0.0
        %806 = vmatprep.subr.mxu0 0.0
        %807 = vmatpush1.msra.mxu0 0.0
        %808 = vmatprep.subr.mxu0 0.0
        %809 = vmatpush1.msra.mxu0 0.0
        %810 = vmatprep.subr.mxu0 0.0
        %811 = vmatpush1.msra.mxu0 0.0
        %812 = vmatprep.subr.mxu0 0.0
        %813 = vmatpush1.msra.mxu0 0.0
        %814 = vmatprep.subr.mxu0 0.0
        %815 = vmatpush1.msra.mxu0 0.0
        %816 = vmatprep.subr.mxu0 0.0
        %817 = vmatpush1.msra.mxu0 0.0
        %818 = vmatprep.subr.mxu0 0.0
        %819 = vmatpush1.msra.mxu0 0.0
        %820 = vmatprep.subr.mxu0 0.0
        %821 = vmatpush1.msra.mxu0 0.0
        %822 = vmatprep.subr.mxu0 0.0
        %823 = vmatpush1.msra.mxu0 0.0
        %824 = vmatprep.subr.mxu0 0.0
        %825 = vmatpush1.msra.mxu0 0.0
        %826 = vmatprep.subr.mxu0 0.0
        %827 = vmatpush1.msra.mxu0 0.0
        %828 = vmatprep.subr.mxu0 0.0
        %829 = vmatpush1.msra.mxu0 0.0
        %830 = vmatprep.mubr.f32.mxu0 0.0
        %831 = vmatmul.mubr.f32.gmra.mrb[0].mxu0 %v764
        %v832 = vpop.f32.mrb[0].mxu0
        %v833 = vadd.f32 %v762, %v832
        %v834 = vpop.f32.mrb[0].mxu0
        %835 = vdwg.mxu0
        %v836 = vadd.f32 %v833, %v193
        %837 = vst.msk [vmem:[%s188] sm:$0xff] %vm194, %v836
        %s838 = sand.u32 %s115, 1
        %s839 = scalar_lea.sflag [#allocation3], %s838
        %s840 = sand.u32 %s115, 1
        %s841 = smul.addr %s840, 8
        %s842 = scalar_lea.vmem [#allocation2], %s841
        // Predicated region
        $region37: #{tpu_custom_call.1} parent=35 // pred_check
          %p843 = pneg %p125
        $region38: #{tpu_custom_call.1} parent=35 // pred_check_branch
          %845 = sbr.rel (%p843) target = $region40
        $region39: #{tpu_custom_call.1} parent=35 // pred_region
          %s847 = ssub.s32 128, 128
          %848 = vsyncadd %s839, %s847
          %s849 = smul.addr %s18, 128
          %s850 = scalar_lea.hbm %s4, %s849
          %s852 = sshll.u32 %s842, 4
          %s853 = int_to_ptr.vmem [resolvable:$true] %s852
          %855 = dma.vmem_to_hbm [thread:$0]  %s853, 128, %s850, %s839
        $region40: #{tpu_custom_call.1} parent=35 // pred_fallthru
          _
      $region36: #{tpu_custom_call.1} parent=5 // pred_fallthru
        _
      %p856 = scmp.le.s32.totalorder 2, %s13
      // Predicated region
      $region41: #{tpu_custom_call.1} parent=5 // pred_check
        %p857 = pneg %p856
      $region42: #{tpu_custom_call.1} parent=5 // pred_check_branch
        %859 = sbr.rel (%p857) target = $region44
      $region43: #{tpu_custom_call.1} parent=5 // pred_region
        %s860 = ssub.s32 %s13, 2
        // Predicated region
        $region45: #{tpu_custom_call.1} parent=43 // pred_check
          %p861 = pneg %p131
        $region46: #{tpu_custom_call.1} parent=43 // pred_check_branch
          %863 = sbr.rel (%p861) target = $region48
        $region47: #{tpu_custom_call.1} parent=43 // pred_region
          %s864 = sand.u32 %s116, 1
          %s865 = scalar_lea.sflag [#allocation3], %s864
          %s866 = sand.u32 %s116, 1
          %s867 = smul.addr %s866, 8
          %s868 = scalar_lea.vmem [#allocation2], %s867
          %869 = dma.done %s865, 128
        $region48: #{tpu_custom_call.1} parent=43 // pred_fallthru
          _
      $region44: #{tpu_custom_call.1} parent=5 // pred_fallthru
        _
    $region6: #{tpu_custom_call.1} parent=1 // loop_footer
      %s17 = sadd.s32 1, %s13
    $region7: #{tpu_custom_call.1} parent=1 // loop_footer_branch
      %12 = sbr.rel target = $region3
    $region8: #{tpu_custom_call.1} parent=1 // loop_exit
      _
    %870 = vsyncpa [#allocation3], 1
    %s871 = scalar_lea.sflag [#allocation3], 1
    %872 = vsyncpa %s871, 1

</llo_original>
